<compile_context>
chip_gen: v6e
topology: v6e:2x2x1
jax: 0.10.0
libtpu: 0.0.40
codegen_flags: <defaults>
</compile_context>

<pallas_src>
import numpy as np
import jax
import jax.numpy as jnp
from jax.experimental import pallas as pl
from jax.experimental.pallas import tpu as pltpu

LANES = 128                    # lane axis width (last dim of the 2-D view)
BLOCK_ROWS = 4096              # 4096*128*4B = 2 MiB per buffer
VMEM_LIMIT_BYTES = 32 * 1024 * 1024   # covers in+out double buffers + temporaries


def _round_up(a, b):
    return ((a + b - 1) // b) * b


def logint_kernel(x_ref, o_ref):
    # x_ref / o_ref: (block_rows, 128) lane-dense tiles.
    x = x_ref[...].astype(jnp.float32)   # compute in f32 (v5e has no bf16 VALU)

    # x > 1 branch, Horner form:
    #   ((x*(1/36 + log(x)/6) + 0.75)*x + 11/12)*x + 1/72
    # log(x) is NaN/-inf on x <= 0 lanes but those lanes are selected away.
    b1 = ((x * (jnp.log(x) * (1.0 / 6.0) + (1.0 / 36.0)) + 0.75) * x
          + (11.0 / 12.0)) * x + (1.0 / 72.0)

    # 0 < x <= 1 branch, Horner form:  x*(1 + x*(1/2 + x*(1/6 + x*(1/24))))
    b2 = x * (1.0 + x * (0.5 + x * ((1.0 / 6.0) + x * (1.0 / 24.0))))

    # x <= 0 branch.  (jnp.expm1 would save one VALU op and be slightly more
    # accurate near 0, but exp(x) - 1 matches the torch reference exactly and
    # is guaranteed to lower through Mosaic.)
    b3 = jnp.exp(x) - 1.0

    out = jnp.where(x > 1.0, b1, jnp.where(x > 0.0, b2, b3))
    o_ref[...] = out.astype(o_ref.dtype)


def _logint_jax(x):
    """Plain-JAX path for the < 128-element ragged tail (same formula)."""
    b1 = ((x * (jnp.log(x) * (1.0 / 6.0) + (1.0 / 36.0)) + 0.75) * x
          + (11.0 / 12.0)) * x + (1.0 / 72.0)
    b2 = x * (1.0 + x * (0.5 + x * ((1.0 / 6.0) + x * (1.0 / 24.0))))
    b3 = jnp.exp(x) - 1.0
    return jnp.where(x > 1.0, b1, jnp.where(x > 0.0, b2, b3))


def _logint_rows(x2d):
    """Run the kernel over a (rows, 128) lane-dense slab."""
    rows = x2d.shape[0]
    # Aim for >= 2 grid steps so the "parallel" axis can feed both TensorCores
    # on v7x; a single full-extent block only for tiny inputs (still legal
    # because block == full array dim).
    block_rows = min(BLOCK_ROWS, _round_up(pl.cdiv(rows, 2), 8))
    if block_rows >= rows:
        block_rows = rows
    grid = (pl.cdiv(rows, block_rows),)

    return pl.pallas_call(
        logint_kernel,
        out_shape=jax.ShapeDtypeStruct((rows, LANES), x2d.dtype),
        grid=grid,
        in_specs=[pl.BlockSpec((block_rows, LANES), lambda i: (i, 0))],
        out_specs=pl.BlockSpec((block_rows, LANES), lambda i: (i, 0)),
        compiler_params=pltpu.CompilerParams(
            dimension_semantics=("parallel",),
            vmem_limit_bytes=VMEM_LIMIT_BYTES,
        ),
    )(x2d)


def logint_forward(x):
    """Pallas equivalent of LogInt.forward (elementwise, shape-preserving)."""
    shape = x.shape
    n = int(np.prod(shape)) if len(shape) > 0 else 1
    if n == 0:
        return jnp.zeros(shape, x.dtype)

    flat = x.reshape(-1)  # metadata-only for contiguous input

    if n % LANES == 0:
        # Hot path: pure metadata reshape, one read + one write of the array.
        out_flat = _logint_rows(flat.reshape(n // LANES, LANES)).reshape(-1)
    else:
        # Aligned prefix goes through the kernel; the < 128-element tail is
        # handled in plain JAX (no full-array pad + slice round trip).
        # TODO(synk): fold the tail into a masked last Pallas block to drop the
        # concatenate for very large ragged inputs.
        n_main = (n // LANES) * LANES
        parts = []
        if n_main:
            parts.append(
                _logint_rows(flat[:n_main].reshape(n_main // LANES, LANES)).reshape(-1)
            )
        parts.append(_logint_jax(flat[n_main:]))
        out_flat = parts[0] if len(parts) == 1 else jnp.concatenate(parts)

    return out_flat.reshape(shape)


if __name__ == "__main__":
    key = jax.random.PRNGKey(0)
    # Small shape; standard normal inputs exercise all three branches
    # (x <= 0, 0 < x <= 1, x > 1).
    x = jax.random.normal(key, (2, 4, 16, 16), dtype=jnp.float32)

    y = logint_forward(x)
    y = jax.block_until_ready(y)

    # Plain-JAX reference mirroring the PyTorch formula literally.
    y_ref = jnp.where(
        x > 1.0,
        x ** 3 / 36 + x ** 3 * jnp.log(x) / 6 + 0.75 * x ** 2 + 11 * x / 12 + 1 / 72,
        jnp.where(x > 0.0,
                  x ** 4 / 24 + x ** 3 / 6 + x ** 2 / 2 + x,
                  jnp.exp(x) - 1.0),
    )

    assert y.shape == y_ref.shape == (2, 4, 16, 16)
    np.testing.assert_allclose(np.asarray(y), np.asarray(y_ref), rtol=1e-5, atol=1e-6)

    print("KERNEL_OK")
</pallas_src>

<mosaic_0001>
module attributes {stable_mosaic.version = 11 : i64} {
  func.func @logint_kernel(%arg0: i32, %arg1: memref<8x128xf32, #tpu.memory_space<vmem>>, %arg2: memref<8x128xf32, #tpu.memory_space<vmem>>) attributes {dimension_semantics = [#tpu.dimension_semantics<parallel>], iteration_bounds = array<i64: 2>, scalar_prefetch = 0 : i64, scratch_operands = 0 : i64, tpu.core_type = #tpu.core_type<tc>, window_params = [{transform_indices = @transform_0, window_bounds = array<i64: 8, 128>}, {transform_indices = @transform_1, window_bounds = array<i64: 8, 128>}]} {
    %c0 = arith.constant 0 : index
    %c0_0 = arith.constant 0 : index
    %0 = vector.load %arg1[%c0, %c0_0] : memref<8x128xf32, #tpu.memory_space<vmem>>, vector<8x128xf32>
    %1 = math.log %0 : vector<8x128xf32>
    %cst = arith.constant 0.166666672 : f32
    %2 = vector.broadcast %cst : f32 to vector<8x128xf32>
    %3 = arith.mulf %1, %2 : vector<8x128xf32>
    %cst_1 = arith.constant 0.027777778 : f32
    %4 = vector.broadcast %cst_1 : f32 to vector<8x128xf32>
    %5 = arith.addf %3, %4 : vector<8x128xf32>
    %6 = arith.mulf %0, %5 : vector<8x128xf32>
    %cst_2 = arith.constant 7.500000e-01 : f32
    %7 = vector.broadcast %cst_2 : f32 to vector<8x128xf32>
    %8 = arith.addf %6, %7 : vector<8x128xf32>
    %9 = arith.mulf %8, %0 : vector<8x128xf32>
    %cst_3 = arith.constant 0.916666686 : f32
    %10 = vector.broadcast %cst_3 : f32 to vector<8x128xf32>
    %11 = arith.addf %9, %10 : vector<8x128xf32>
    %12 = arith.mulf %11, %0 : vector<8x128xf32>
    %cst_4 = arith.constant 0.013888889 : f32
    %13 = vector.broadcast %cst_4 : f32 to vector<8x128xf32>
    %14 = arith.addf %12, %13 : vector<8x128xf32>
    %cst_5 = arith.constant 0.0416666679 : f32
    %15 = vector.broadcast %cst_5 : f32 to vector<8x128xf32>
    %16 = arith.mulf %0, %15 : vector<8x128xf32>
    %cst_6 = arith.constant 0.166666672 : f32
    %17 = vector.broadcast %cst_6 : f32 to vector<8x128xf32>
    %18 = arith.addf %17, %16 : vector<8x128xf32>
    %19 = arith.mulf %0, %18 : vector<8x128xf32>
    %cst_7 = arith.constant 5.000000e-01 : f32
    %20 = vector.broadcast %cst_7 : f32 to vector<8x128xf32>
    %21 = arith.addf %20, %19 : vector<8x128xf32>
    %22 = arith.mulf %0, %21 : vector<8x128xf32>
    %cst_8 = arith.constant 1.000000e+00 : f32
    %23 = vector.broadcast %cst_8 : f32 to vector<8x128xf32>
    %24 = arith.addf %23, %22 : vector<8x128xf32>
    %25 = arith.mulf %0, %24 : vector<8x128xf32>
    %26 = math.exp %0 : vector<8x128xf32>
    %cst_9 = arith.constant 1.000000e+00 : f32
    %27 = vector.broadcast %cst_9 : f32 to vector<8x128xf32>
    %28 = arith.subf %26, %27 : vector<8x128xf32>
    %cst_10 = arith.constant 1.000000e+00 : f32
    %29 = vector.broadcast %cst_10 : f32 to vector<8x128xf32>
    %30 = arith.cmpf ogt, %0, %29 : vector<8x128xf32>
    %cst_11 = arith.constant 0.000000e+00 : f32
    %31 = vector.broadcast %cst_11 : f32 to vector<8x128xf32>
    %32 = arith.cmpf ogt, %0, %31 : vector<8x128xf32>
    %33 = arith.select %32, %25, %28 : vector<8x128xi1>, vector<8x128xf32>
    %34 = arith.select %30, %14, %33 : vector<8x128xi1>, vector<8x128xf32>
    %c0_12 = arith.constant 0 : index
    %c0_13 = arith.constant 0 : index
    %35 = vector.load %arg2[%c0_12, %c0_13] : memref<8x128xf32, #tpu.memory_space<vmem>>, vector<8x128xf32>
    tpu.vector_store %arg2[%c0_12, %c0_13], %34 {strides = array<i32>} : memref<8x128xf32, #tpu.memory_space<vmem>>, vector<8x128xf32>,
    return
  }
  func.func @transform_0(%arg0: i32) -> (i32, i32) {
    %c0_i32 = arith.constant 0 : i32
    %c0_i32_0 = arith.constant 0 : i32
    return %arg0, %c0_i32 : i32, i32
  }
  func.func @transform_1(%arg0: i32) -> (i32, i32) {
    %c0_i32 = arith.constant 0 : i32
    %c0_i32_0 = arith.constant 0 : i32
    return %arg0, %c0_i32 : i32, i32
  }
}

</mosaic_0001>

<llo_original>
// kernel: tpu_custom_call.1
$region0: #{tpu_custom_call.1}
  #allocation0 [shape = 'u32[]', space=smem, size = 0x4, offset = 0x4, fixed_abs, tag = 'smem constant byte address 0x4 - core index']
  #allocation1 [shape = 'u32[144,128]{1,0:T(1,128)}', space=vmem, size = 0x12000, scoped, tag = 'internal scratch']
  %s0 = inlined_call_operand.hbm [shape: f32[16,128], index: 0, kind: input, shape index: {}]
  %s1 = inlined_call_operand.hbm [shape: f32[16,128], index: 1, kind: output, shape index: {}]
  %s2 = sld [smem:[#allocation0]]
  $region41: #{tpu_custom_call.1} parent=0
    _
  %s4 = ssub.s32 1, %s2
  %s5 = scalar_select 0, %s4, %s2
  $region1: #{tpu_custom_call.1} parent=0
    #allocation2 [shape = 'u8[8192]{0}', space=vmem, size = 0x2000, scoped, tag = 'input window, operand 0']
    #allocation3 [shape = 's32[2]{0}', space=sflag, size = 0x8, scoped, tag = 'scoped memory for tpu_custom_call.1']
    #allocation4 [shape = 's32[2]{0}', space=sflag, size = 0x8, scoped, tag = 'scoped memory for tpu_custom_call.1']
    #allocation5 [shape = 'u8[8192]{0}', space=vmem, size = 0x2000, scoped, tag = 'output window, operand 0']
    %6 = vsyncpa [#allocation3], 0
    %s7 = scalar_lea.sflag [#allocation3], 1
    %8 = vsyncpa %s7, 0
    %9 = vsyncpa [#allocation4], 0
    %s10 = scalar_lea.sflag [#allocation4], 1
    %11 = vsyncpa %s10, 0
    loop: start=0, step=1, limit=4
    $region2: #{tpu_custom_call.1} parent=1 // loop_pre_header
      _
    $region3: #{tpu_custom_call.1} parent=1 // loop_header
      %s13 = sphi 0, %s17
      %p14 = scmp.ge.s32.totalorder %s13, 4
      %s23 = sphi 0, %s25
      %s26 = sphi 0, %s23
      %s27 = sphi 0, %s26
      %s43 = sphi 0, %s27
      %s49 = sphi 0, %s51
      %s52 = sphi 0, %s49
      %s53 = sphi 0, %s52
      %s69 = sphi 0, %s53
    $region4: #{tpu_custom_call.1} parent=1 // loop_header_branch
      %16 = sbr.rel (%p14) target = $region8
    $region5: #{tpu_custom_call.1} parent=1 // loop_body
      %s18 = ssub.s32 %s13, 1
      %s19 = ssub.s32 %s13, 2
      %s20 = sadd.s32 %s13, 1
      %s21 = ssub.s32 %s13, %s20
      %p22 = scmp.eq.s32.totalorder %s21, 0
      %s24 = sadd.s32 %s23, 1
      %s25 = scalar_select %p22, %s23, %s24
      %p28 = pneg %p22
      %p29 = scmp.eq.s32.totalorder %s13, 1
      %p30 = por %p28, %p29
      %p31 = scmp.ne.s32.totalorder %s23, %s26
      %p32 = scmp.eq.s32.totalorder %s13, 0
      %p33 = por %p31, %p32
      %p34 = scmp.ne.s32.totalorder %s23, %s26
      %p35 = scmp.eq.s32.totalorder %s18, 1
      %p36 = por %p34, %p35
      %p37 = scmp.ne.s32.totalorder %s26, %s27
      %p38 = scmp.eq.s32.totalorder %s18, 0
      %p39 = por %p37, %p38
      %p40 = scmp.ne.s32.totalorder %s26, %s27
      %p41 = scmp.eq.s32.totalorder %s19, 1
      %p42 = por %p40, %p41
      %p44 = scmp.ne.s32.totalorder %s27, %s43
      %p45 = scmp.eq.s32.totalorder %s19, 0
      %p46 = por %p44, %p45
      %s47 = ssub.s32 %s13, %s20
      %p48 = scmp.eq.s32.totalorder %s47, 0
      %s50 = sadd.s32 %s49, 1
      %s51 = scalar_select %p48, %s49, %s50
      %p54 = pneg %p48
      %p55 = scmp.eq.s32.totalorder %s13, 1
      %p56 = por %p54, %p55
      %p57 = scmp.ne.s32.totalorder %s49, %s52
      %p58 = scmp.eq.s32.totalorder %s13, 0
      %p59 = por %p57, %p58
      %p60 = scmp.ne.s32.totalorder %s49, %s52
      %p61 = scmp.eq.s32.totalorder %s18, 1
      %p62 = por %p60, %p61
      %p63 = scmp.ne.s32.totalorder %s52, %s53
      %p64 = scmp.eq.s32.totalorder %s18, 0
      %p65 = por %p63, %p64
      %p66 = scmp.ne.s32.totalorder %s52, %s53
      %p67 = scmp.eq.s32.totalorder %s19, 1
      %p68 = por %p66, %p67
      %p70 = scmp.ne.s32.totalorder %s53, %s69
      %p71 = scmp.eq.s32.totalorder %s19, 0
      %p72 = por %p70, %p71
      %p73 = scmp.le.s32.totalorder 1, %s13
      %p74 = scmp.lt.s32.totalorder %s13, 3
      %p75 = pnand %p73, %p74
      %p76 = pneg %p75
      // Predicated region
      $region9: #{tpu_custom_call.1} parent=5 // pred_check
        _
      $region10: #{tpu_custom_call.1} parent=5 // pred_check_branch
        %78 = sbr.rel (%p75) target = $region12
      $region11: #{tpu_custom_call.1} parent=5 // pred_region
        %s79 = ssub.s32 %s13, 1
      $region12: #{tpu_custom_call.1} parent=5 // pred_fallthru
        _
      %p80 = scmp.lt.s32.totalorder %s13, 2
      // Predicated region
      $region13: #{tpu_custom_call.1} parent=5 // pred_check
        %p81 = pneg %p80
      $region14: #{tpu_custom_call.1} parent=5 // pred_check_branch
        %83 = sbr.rel (%p81) target = $region16
      $region15: #{tpu_custom_call.1} parent=5 // pred_region
        // Predicated region
        $region17: #{tpu_custom_call.1} parent=15 // pred_check
          %p84 = pneg %p33
        $region18: #{tpu_custom_call.1} parent=15 // pred_check_branch
          %86 = sbr.rel (%p84) target = $region20
        $region19: #{tpu_custom_call.1} parent=15 // pred_region
          %s87 = sand.u32 %s23, 1
          %s88 = scalar_lea.sflag [#allocation3], %s87
          %s89 = sand.u32 %s23, 1
          %s90 = smul.addr %s89, 8
          %s91 = scalar_lea.vmem [#allocation2], %s90
          %s93 = ssub.s32 128, 128
          %94 = vsyncadd %s88, %s93
          %s95 = smul.addr %s13, 128
          %s96 = scalar_lea.hbm %s0, %s95
          %s98 = sshll.u32 %s91, 4
          %s99 = int_to_ptr.vmem [resolvable:$true] %s98
          %101 = dma.hbm_to_vmem [thread:$0]  %s96, 128, %s99, %s88
        $region20: #{tpu_custom_call.1} parent=15 // pred_fallthru
          _
      $region16: #{tpu_custom_call.1} parent=5 // pred_fallthru
        _
      %p102 = scmp.le.s32.totalorder 1, %s13
      %p103 = scmp.lt.s32.totalorder %s13, 3
      %p104 = pnand %p102, %p103
      %p105 = pneg %p104
      // Predicated region
      $region21: #{tpu_custom_call.1} parent=5 // pred_check
        _
      $region22: #{tpu_custom_call.1} parent=5 // pred_check_branch
        %107 = sbr.rel (%p104) target = $region24
      $region23: #{tpu_custom_call.1} parent=5 // pred_region
        %s108 = ssub.s32 %s13, 1
        %s109 = sand.u32 %s26, 1
        %s110 = scalar_lea.sflag [#allocation3], %s109
        %s111 = sand.u32 %s26, 1
        %s112 = smul.addr %s111, 8
        %s113 = scalar_lea.vmem [#allocation2], %s112
        // Predicated region
        $region25: #{tpu_custom_call.1} parent=23 // pred_check
          %p114 = pneg %p39
        $region26: #{tpu_custom_call.1} parent=23 // pred_check_branch
          %116 = sbr.rel (%p114) target = $region28
        $region27: #{tpu_custom_call.1} parent=23 // pred_region
          %117 = dma.done %s110, 128
        $region28: #{tpu_custom_call.1} parent=23 // pred_fallthru
          _
        %s118 = sand.u32 %s26, 1
        %s119 = scalar_lea.sflag [#allocation3], %s118
        %s120 = sand.u32 %s26, 1
        %s121 = smul.addr %s120, 8
        %s122 = scalar_lea.vmem [#allocation2], %s121
        %p123 = pneg %p39
        %p124 = pneg %p36
        %p125 = pneg %p65
        %p126 = pneg %p62
        %s127 = sand.u32 %s52, 1
        %s128 = scalar_lea.sflag [#allocation4], %s127
        %s129 = sand.u32 %s52, 1
        %s130 = smul.addr %s129, 8
        %s131 = scalar_lea.vmem [#allocation5], %s130
        %v132 = vld [vmem:[%s113] sm:$0xff]
        %v133 = vlog2.pop %v132
        %v134 = vmul.f32 %v133, 0.6931472
        %v135 = vmul.f32 %v134, 0.16666667
        %v136 = vadd.f32 %v135, 0.027777778
        %v137 = vmul.f32 %v132, %v136
        %v138 = vadd.f32 %v137, 0.75
        %v139 = vmul.f32 %v138, %v132
        %v140 = vadd.f32 %v139, 0.9166667
        %v141 = vmul.f32 %v140, %v132
        %v142 = vadd.f32 %v141, 0.013888889
        %v143 = vmul.f32 %v132, 0.041666668
        %v144 = vadd.f32 %v143, 0.16666667
        %v145 = vmul.f32 %v132, %v144
        %v146 = vadd.f32 %v145, 0.5
        %v147 = vmul.f32 %v132, %v146
        %v148 = vadd.f32 %v147, 1.0
        %v149 = vmul.f32 %v132, %v148
        %v150 = vmul.f32 %v132, 1.442695
        %v151 = vpow.pop %v150
        %v152 = vsub.f32 %v151, 1.0
        %vm153 = vcmp.gt.f32.partialorder %v132, 1.0
        %vm154 = vcmp.gt.f32.partialorder %v132, 0.0
        %v155 = vsel %vm154, %v149, %v152
        %v156 = vsel %vm153, %v142, %v155
        %157 = vst [vmem:[%s131] sm:$0xff] %v156
        %s158 = sand.u32 %s52, 1
        %s159 = scalar_lea.sflag [#allocation4], %s158
        %s160 = sand.u32 %s52, 1
        %s161 = smul.addr %s160, 8
        %s162 = scalar_lea.vmem [#allocation5], %s161
        // Predicated region
        $region29: #{tpu_custom_call.1} parent=23 // pred_check
          %p163 = pneg %p62
        $region30: #{tpu_custom_call.1} parent=23 // pred_check_branch
          %165 = sbr.rel (%p163) target = $region32
        $region31: #{tpu_custom_call.1} parent=23 // pred_region
          %s167 = ssub.s32 128, 128
          %168 = vsyncadd %s159, %s167
          %s169 = smul.addr %s18, 128
          %s170 = scalar_lea.hbm %s1, %s169
          %s172 = sshll.u32 %s162, 4
          %s173 = int_to_ptr.vmem [resolvable:$true] %s172
          %175 = dma.vmem_to_hbm [thread:$0]  %s173, 128, %s170, %s159
        $region32: #{tpu_custom_call.1} parent=23 // pred_fallthru
          _
      $region24: #{tpu_custom_call.1} parent=5 // pred_fallthru
        _
      %p176 = scmp.le.s32.totalorder 2, %s13
      // Predicated region
      $region33: #{tpu_custom_call.1} parent=5 // pred_check
        %p177 = pneg %p176
      $region34: #{tpu_custom_call.1} parent=5 // pred_check_branch
        %179 = sbr.rel (%p177) target = $region36
      $region35: #{tpu_custom_call.1} parent=5 // pred_region
        %s180 = ssub.s32 %s13, 2
        // Predicated region
        $region37: #{tpu_custom_call.1} parent=35 // pred_check
          %p181 = pneg %p68
        $region38: #{tpu_custom_call.1} parent=35 // pred_check_branch
          %183 = sbr.rel (%p181) target = $region40
        $region39: #{tpu_custom_call.1} parent=35 // pred_region
          %s184 = sand.u32 %s53, 1
          %s185 = scalar_lea.sflag [#allocation4], %s184
          %s186 = sand.u32 %s53, 1
          %s187 = smul.addr %s186, 8
          %s188 = scalar_lea.vmem [#allocation5], %s187
          %189 = dma.done %s185, 128
        $region40: #{tpu_custom_call.1} parent=35 // pred_fallthru
          _
      $region36: #{tpu_custom_call.1} parent=5 // pred_fallthru
        _
    $region6: #{tpu_custom_call.1} parent=1 // loop_footer
      %s17 = sadd.s32 1, %s13
    $region7: #{tpu_custom_call.1} parent=1 // loop_footer_branch
      %12 = sbr.rel target = $region3
    $region8: #{tpu_custom_call.1} parent=1 // loop_exit
      _
    %190 = vsyncpa [#allocation3], 1
    %s191 = scalar_lea.sflag [#allocation3], 1
    %192 = vsyncpa %s191, 1
    %193 = vsyncpa [#allocation4], 1
    %s194 = scalar_lea.sflag [#allocation4], 1
    %195 = vsyncpa %s194, 1

</llo_original>
